<compile_context>
chip_gen: v7x
topology: tpu7x:2x2x1
jax: 0.10.0
libtpu: 0.0.40
codegen_flags: <defaults>
</compile_context>

<pallas_src>
import jax
import jax.numpy as jnp
from jax.experimental import pallas as pl
from jax.experimental.pallas import tpu as pltpu

HIDDEN_DIM = 64
_LANE = 128                 # batch-tile granularity (lane width / bf16-safe)
X_DTYPE = jnp.bfloat16      # streaming dtype for x and w1
X_BYTES = 2


def _cdiv(a, b):
    return -(-a // b)


def _round_up(n, m):
    return _cdiv(n, m) * m


def _vmem_budget_bytes():
    """~70% of physical VMEM (v7x: 64 MiB, v5e/v6e: 128 MiB), with fallback."""
    cap = 64 * 1024 * 1024  # conservative fallback = v7x
    try:
        info = pltpu.get_tpu_info()
        cap = int(getattr(info, "vmem_capacity_bytes", cap))
    except Exception:
        pass
    return int(cap * 0.70)


def _discriminator_kernel(x_ref, w1_ref, b1_ref, w2_ref, b2_ref, w3_ref, b3_ref,
                          o_ref):
    """Fused 3-layer MLP on one (tile_b, input_dim) batch tile."""
    # Layer 1: bf16 x @ bf16 w1, f32 accumulate (single-pass MXU).
    h1 = jnp.dot(x_ref[...], w1_ref[...], preferred_element_type=jnp.float32)
    h1 = h1 + b1_ref[...]
    h1 = jnp.where(h1 > 0, h1, 0.2 * h1)              # LeakyReLU(0.2), f32 VPU

    # Layer 2: f32 Linear + LeakyReLU(0.2).
    h2 = jnp.dot(h1, w2_ref[...], preferred_element_type=jnp.float32) + b2_ref[...]
    h2 = jnp.where(h2 > 0, h2, 0.2 * h2)

    # Layer 3: Linear(HIDDEN_DIM, 1); b3 is a scalar read from SMEM.
    logits = jnp.dot(h2, w3_ref[...], preferred_element_type=jnp.float32)
    # Relayout (tile_b, 1) -> (1, tile_b): sigmoid runs on dense vregs and the
    # store is a lane-dense vst instead of masked 1-lane partial stores.
    logits_t = jnp.transpose(logits) + b3_ref[0, 0]
    o_ref[...] = jax.nn.sigmoid(logits_t).astype(o_ref.dtype)


def discriminator_forward(x, params, *, tile_b=None):
    """x: [B, input_dim] float32 (or bf16). Returns [B, 1] float32 probs."""
    w1, b1, w2, b2, w3, b3 = params
    B, input_dim = x.shape

    budget = _vmem_budget_bytes()
    # Resident weights/biases, budgeted as double-buffered (Pallas default).
    weight_bytes = 2 * (input_dim * HIDDEN_DIM * X_BYTES       # w1 (bf16)
                        + HIDDEN_DIM * HIDDEN_DIM * 4          # w2
                        + 3 * HIDDEN_DIM * 4)                  # b1, b2, w3
    # Per-batch-row VMEM: double-buffered bf16 x row, double-buffered f32
    # output element, f32 intermediates (h1, h2, logits, logits^T).
    per_row = 2 * input_dim * X_BYTES + 2 * 4 + 4 * HIDDEN_DIM * 4

    if tile_b is None:
        avail = budget - weight_bytes - (2 << 20)
        cap = max(_LANE, (avail // per_row) // _LANE * _LANE) if avail > 0 else _LANE
        # Scale tile_b with input_dim so each x DMA is a few MiB.
        target = _round_up(_cdiv(4 << 20, max(1, input_dim * X_BYTES)), _LANE)
        tile_b = min(cap, max(2048, target), 8192)
    else:
        tile_b = max(_LANE, _round_up(tile_b, _LANE))
    # Don't pad a tiny batch up to a huge tile.
    tile_b = min(tile_b, _round_up(B, _LANE))
    # v7x megacore: if everything fits one tile but the batch could fill two,
    # halve the tile so both TensorCores get a "parallel" grid step.
    if _round_up(B, tile_b) == tile_b and _round_up(B, _LANE) >= 2 * _LANE:
        tile_b = _round_up(_cdiv(B, 2), _LANE)

    b_pad = _round_up(B, tile_b)
    num_tiles = b_pad // tile_b

    # Cast in the wrapper so the HBM stream itself is bf16 (halved bytes).
    xh = x.astype(X_DTYPE)
    if b_pad != B:
        xh = jnp.pad(xh, ((0, b_pad - B), (0, 0)))
    w1h = w1.astype(X_DTYPE)

    vmem_limit = int(min(budget,
                         max(32 << 20, weight_bytes + per_row * tile_b + (4 << 20))))

    # Advisory cost estimate for XLA's scheduler around the custom call.
    flops = 2 * b_pad * (input_dim * HIDDEN_DIM
                         + HIDDEN_DIM * HIDDEN_DIM + HIDDEN_DIM)
    param_bytes = (input_dim * HIDDEN_DIM * X_BYTES
                   + HIDDEN_DIM * HIDDEN_DIM * 4
                   + (3 * HIDDEN_DIM + 1) * 4)
    cost = pl.CostEstimate(
        flops=flops, transcendentals=b_pad,
        bytes_accessed=X_BYTES * b_pad * input_dim + 4 * b_pad + param_bytes)

    def resident(shape):
        # Full-array block, constant index_map -> stays in VMEM across steps.
        return pl.BlockSpec(tuple(shape), lambda i: (0, 0))

    out = pl.pallas_call(
        _discriminator_kernel,
        out_shape=jax.ShapeDtypeStruct((num_tiles, tile_b), jnp.float32),
        grid=(num_tiles,),
        in_specs=[
            pl.BlockSpec((tile_b, input_dim), lambda i: (i, 0)),     # x tile bf16
            resident(w1h.shape),                                     # w1 bf16
            resident(b1.shape),                                      # b1
            resident(w2.shape),                                      # w2
            resident(b2.shape),                                      # b2
            resident(w3.shape),                                      # w3
            pl.BlockSpec((1, 1), lambda i: (0, 0),
                         memory_space=pltpu.MemorySpace.SMEM),       # b3 scalar
        ],
        out_specs=pl.BlockSpec((1, tile_b), lambda i: (i, 0)),       # lane-dense
        compiler_params=pltpu.CompilerParams(
            dimension_semantics=("parallel",),
            vmem_limit_bytes=vmem_limit,
        ),
        cost_estimate=cost,
    )(xh, w1h, b1, w2, b2, w3, b3)

    out = out.reshape(b_pad, 1)
    return out[:B] if b_pad != B else out


def init_discriminator_params(key, input_dim):
    """PyTorch-style init: U(-1/sqrt(fan_in), 1/sqrt(fan_in)).

    Weights stored as [in, out] (pre-transposed vs. torch's [out, in]); biases
    as [1, out] so they broadcast cleanly in the kernel (b3 ends up [1, 1]).
    """
    dims = [(input_dim, HIDDEN_DIM), (HIDDEN_DIM, HIDDEN_DIM), (HIDDEN_DIM, 1)]
    params = []
    for (fan_in, fan_out) in dims:
        key, kw, kb = jax.random.split(key, 3)
        bound = 1.0 / jnp.sqrt(jnp.float32(fan_in))
        w = jax.random.uniform(kw, (fan_in, fan_out), jnp.float32, -bound, bound)
        b = jax.random.uniform(kb, (1, fan_out), jnp.float32, -bound, bound)
        params.extend([w, b])
    return tuple(params)


def _reference_forward(x, params):
    """Pure-JAX reference mirroring the kernel's bf16 x/w1 streaming."""
    w1, b1, w2, b2, w3, b3 = params
    h = jnp.dot(x.astype(X_DTYPE), w1.astype(X_DTYPE),
                preferred_element_type=jnp.float32) + b1
    h = jnp.where(h > 0, h, 0.2 * h)
    h = jnp.dot(h, w2, preferred_element_type=jnp.float32) + b2
    h = jnp.where(h > 0, h, 0.2 * h)
    return jax.nn.sigmoid(jnp.dot(h, w3, preferred_element_type=jnp.float32) + b3)


if __name__ == "__main__":
    key = jax.random.PRNGKey(0)
    key, kx, kx2 = jax.random.split(key, 3)

    B, INPUT_DIM = 8, 16
    x = jax.random.normal(kx, (B, INPUT_DIM), jnp.float32)
    params = init_discriminator_params(key, INPUT_DIM)

    # Single-tile path.
    out = jax.block_until_ready(discriminator_forward(x, params))
    ref = _reference_forward(x, params)
    assert out.shape == (B, 1), out.shape
    assert jnp.allclose(out, ref, atol=1e-4, rtol=1e-4), "mismatch vs reference"

    # Multi-tile path (grid of 3: batch 300 -> padded 384 at tile_b=128) to
    # exercise the pipelined/tiled code path and remainder handling.
    B2 = 300
    x2 = jax.random.normal(kx2, (B2, INPUT_DIM), jnp.float32)
    out2 = jax.block_until_ready(discriminator_forward(x2, params, tile_b=128))
    ref2 = _reference_forward(x2, params)
    assert out2.shape == (B2, 1), out2.shape
    assert jnp.allclose(out2, ref2, atol=1e-4, rtol=1e-4), "tiled mismatch"

    print("KERNEL_OK")
</pallas_src>

<mosaic_0001>
module attributes {stable_mosaic.version = 11 : i64} {
  func.func @_discriminator_kernel(%arg0: i32, %arg1: memref<128x16xbf16, #tpu.memory_space<vmem>>, %arg2: memref<16x64xbf16, #tpu.memory_space<vmem>>, %arg3: memref<1x64xf32, #tpu.memory_space<vmem>>, %arg4: memref<64x64xf32, #tpu.memory_space<vmem>>, %arg5: memref<1x64xf32, #tpu.memory_space<vmem>>, %arg6: memref<64x1xf32, #tpu.memory_space<vmem>>, %arg7: memref<1x1xf32, #tpu.memory_space<smem>>, %arg8: memref<1x128xf32, #tpu.memory_space<vmem>>) attributes {dimension_semantics = [#tpu.dimension_semantics<parallel>], iteration_bounds = array<i64: 1>, scalar_prefetch = 0 : i64, scratch_operands = 0 : i64, tpu.core_type = #tpu.core_type<tc>, window_params = [{transform_indices = @transform_0, window_bounds = array<i64: 128, 16>}, {pipeline_mode = #tpu.pipeline_mode<synchronous>, transform_indices = @transform_1, window_bounds = array<i64: 16, 64>}, {pipeline_mode = #tpu.pipeline_mode<synchronous>, transform_indices = @transform_2, window_bounds = array<i64: 1, 64>}, {pipeline_mode = #tpu.pipeline_mode<synchronous>, transform_indices = @transform_3, window_bounds = array<i64: 64, 64>}, {pipeline_mode = #tpu.pipeline_mode<synchronous>, transform_indices = @transform_4, window_bounds = array<i64: 1, 64>}, {pipeline_mode = #tpu.pipeline_mode<synchronous>, transform_indices = @transform_5, window_bounds = array<i64: 64, 1>}, {transform_indices = @transform_6, window_bounds = array<i64: 1, 1>}, {transform_indices = @transform_7, window_bounds = array<i64: 1, 128>}]} {
    %c0 = arith.constant 0 : index
    %c0_0 = arith.constant 0 : index
    %0 = vector.load %arg1[%c0, %c0_0] : memref<128x16xbf16, #tpu.memory_space<vmem>>, vector<128x16xbf16>
    %c0_1 = arith.constant 0 : index
    %c0_2 = arith.constant 0 : index
    %1 = vector.load %arg2[%c0_1, %c0_2] : memref<16x64xbf16, #tpu.memory_space<vmem>>, vector<16x64xbf16>
    %cst = arith.constant dense<0.000000e+00> : vector<128x64xf32>
    %2 = tpu.matmul %0, %1, %cst {dimension_numbers = #tpu.dot_dimension_numbers<[1], [0], [0], [1], [0, 0, 1, 1], [], []>} : vector<128x16xbf16>, vector<16x64xbf16>, vector<128x64xf32> -> vector<128x64xf32>
    %c0_3 = arith.constant 0 : index
    %c0_4 = arith.constant 0 : index
    %3 = vector.load %arg3[%c0_3, %c0_4] : memref<1x64xf32, #tpu.memory_space<vmem>>, vector<1x64xf32>
    %4 = vector.broadcast %3 : vector<1x64xf32> to vector<128x64xf32>
    %5 = arith.addf %2, %4 : vector<128x64xf32>
    %cst_5 = arith.constant 0.000000e+00 : f32
    %6 = vector.broadcast %cst_5 : f32 to vector<128x64xf32>
    %7 = arith.cmpf ogt, %5, %6 : vector<128x64xf32>
    %cst_6 = arith.constant 2.000000e-01 : f32
    %8 = vector.broadcast %cst_6 : f32 to vector<128x64xf32>
    %9 = arith.mulf %8, %5 : vector<128x64xf32>
    %10 = arith.select %7, %5, %9 : vector<128x64xi1>, vector<128x64xf32>
    %c0_7 = arith.constant 0 : index
    %c0_8 = arith.constant 0 : index
    %11 = vector.load %arg4[%c0_7, %c0_8] : memref<64x64xf32, #tpu.memory_space<vmem>>, vector<64x64xf32>
    %cst_9 = arith.constant dense<0.000000e+00> : vector<128x64xf32>
    %12 = tpu.matmul %10, %11, %cst_9 {dimension_numbers = #tpu.dot_dimension_numbers<[1], [0], [0], [1], [0, 0, 1, 1], [], []>} : vector<128x64xf32>, vector<64x64xf32>, vector<128x64xf32> -> vector<128x64xf32>
    %c0_10 = arith.constant 0 : index
    %c0_11 = arith.constant 0 : index
    %13 = vector.load %arg5[%c0_10, %c0_11] : memref<1x64xf32, #tpu.memory_space<vmem>>, vector<1x64xf32>
    %14 = vector.broadcast %13 : vector<1x64xf32> to vector<128x64xf32>
    %15 = arith.addf %12, %14 : vector<128x64xf32>
    %cst_12 = arith.constant 0.000000e+00 : f32
    %16 = vector.broadcast %cst_12 : f32 to vector<128x64xf32>
    %17 = arith.cmpf ogt, %15, %16 : vector<128x64xf32>
    %cst_13 = arith.constant 2.000000e-01 : f32
    %18 = vector.broadcast %cst_13 : f32 to vector<128x64xf32>
    %19 = arith.mulf %18, %15 : vector<128x64xf32>
    %20 = arith.select %17, %15, %19 : vector<128x64xi1>, vector<128x64xf32>
    %c0_14 = arith.constant 0 : index
    %c0_15 = arith.constant 0 : index
    %21 = vector.load %arg6[%c0_14, %c0_15] : memref<64x1xf32, #tpu.memory_space<vmem>>, vector<64x1xf32>
    %cst_16 = arith.constant dense<0.000000e+00> : vector<128x1xf32>
    %22 = tpu.matmul %20, %21, %cst_16 {dimension_numbers = #tpu.dot_dimension_numbers<[1], [0], [0], [1], [0, 0, 1, 1], [], []>} : vector<128x64xf32>, vector<64x1xf32>, vector<128x1xf32> -> vector<128x1xf32>
    %23 = tpu.transpose %22, [1, 0] : vector<128x1xf32> -> vector<1x128xf32>
    %c0_17 = arith.constant 0 : index
    %c0_18 = arith.constant 0 : index
    %24 = memref.load %arg7[%c0_17, %c0_18] : memref<1x1xf32, #tpu.memory_space<smem>>
    %25 = vector.broadcast %24 : f32 to vector<1x128xf32>
    %26 = arith.addf %23, %25 : vector<1x128xf32>
    %27 = arith.negf %26 : vector<1x128xf32>
    %28 = math.exp %27 : vector<1x128xf32>
    %cst_19 = arith.constant 1.000000e+00 : f32
    %29 = vector.broadcast %cst_19 : f32 to vector<1x128xf32>
    %30 = arith.addf %29, %28 : vector<1x128xf32>
    %31 = arith.divf %29, %30 : vector<1x128xf32>
    %c0_20 = arith.constant 0 : index
    %c0_21 = arith.constant 0 : index
    %32 = vector.load %arg8[%c0_20, %c0_21] : memref<1x128xf32, #tpu.memory_space<vmem>>, vector<1x128xf32>
    tpu.vector_store %arg8[%c0_20, %c0_21], %31 {strides = array<i32>} : memref<1x128xf32, #tpu.memory_space<vmem>>, vector<1x128xf32>,
    return
  }
  func.func @transform_0(%arg0: i32) -> (i32, i32) {
    %c0_i32 = arith.constant 0 : i32
    %c0_i32_0 = arith.constant 0 : i32
    return %arg0, %c0_i32 : i32, i32
  }
  func.func @transform_1(%arg0: i32) -> (i32, i32) {
    %c0_i32 = arith.constant 0 : i32
    %c0_i32_0 = arith.constant 0 : i32
    %c0_i32_1 = arith.constant 0 : i32
    return %c0_i32, %c0_i32_0 : i32, i32
  }
  func.func @transform_2(%arg0: i32) -> (i32, i32) {
    %c0_i32 = arith.constant 0 : i32
    %c0_i32_0 = arith.constant 0 : i32
    %c0_i32_1 = arith.constant 0 : i32
    return %c0_i32, %c0_i32_0 : i32, i32
  }
  func.func @transform_3(%arg0: i32) -> (i32, i32) {
    %c0_i32 = arith.constant 0 : i32
    %c0_i32_0 = arith.constant 0 : i32
    %c0_i32_1 = arith.constant 0 : i32
    return %c0_i32, %c0_i32_0 : i32, i32
  }
  func.func @transform_4(%arg0: i32) -> (i32, i32) {
    %c0_i32 = arith.constant 0 : i32
    %c0_i32_0 = arith.constant 0 : i32
    %c0_i32_1 = arith.constant 0 : i32
    return %c0_i32, %c0_i32_0 : i32, i32
  }
  func.func @transform_5(%arg0: i32) -> (i32, i32) {
    %c0_i32 = arith.constant 0 : i32
    %c0_i32_0 = arith.constant 0 : i32
    %c0_i32_1 = arith.constant 0 : i32
    return %c0_i32, %c0_i32_0 : i32, i32
  }
  func.func @transform_6(%arg0: i32) -> (i32, i32) {
    %c0_i32 = arith.constant 0 : i32
    %c0_i32_0 = arith.constant 0 : i32
    %c0_i32_1 = arith.constant 0 : i32
    return %c0_i32, %c0_i32_0 : i32, i32
  }
  func.func @transform_7(%arg0: i32) -> (i32, i32) {
    %c0_i32 = arith.constant 0 : i32
    %c0_i32_0 = arith.constant 0 : i32
    return %arg0, %c0_i32 : i32, i32
  }
}

</mosaic_0001>

<llo_original>
// kernel: tpu_custom_call.1
$region0: #{tpu_custom_call.1}
  #allocation0 [shape = 'u32[]', space=smem, size = 0x4, offset = 0x4, fixed_abs, tag = 'smem constant byte address 0x4 - core index']
  #allocation1 [shape = 'u32[144,128]{1,0:T(1,128)}', space=vmem, size = 0x12000, scoped, tag = 'internal scratch']
  #allocation2 [shape = 'f32[1,1]{1,0:T(1,128)S(6)}', space=smem, size = 0x200, scoped, tag = 'scoped memory for tpu_custom_call.1']
  %s0 = inlined_call_operand.vmem [shape: bf16[128,16], index: 0, kind: input, shape index: {}]
  %s1 = inlined_call_operand.vmem [shape: bf16[16,64], index: 1, kind: input, shape index: {}]
  %s2 = inlined_call_operand.vmem [shape: f32[1,64], index: 2, kind: input, shape index: {}]
  %s3 = inlined_call_operand.vmem [shape: f32[64,64], index: 3, kind: input, shape index: {}]
  %s4 = inlined_call_operand.vmem [shape: f32[1,64], index: 4, kind: input, shape index: {}]
  %s5 = inlined_call_operand.vmem [shape: f32[64,1], index: 5, kind: input, shape index: {}]
  %s6 = inlined_call_operand.<no memory space> [shape: f32[1,1], index: 6, kind: input, shape index: {}]
  %s7 = inlined_call_operand.hbm [shape: f32[1,128], index: 7, kind: output, shape index: {}]
  %s8 = sld [smem:[#allocation0]]
  $region38: #{tpu_custom_call.1} parent=0
    _
  %s10 = ssub.s32 1, %s8
  %s11 = scalar_select 0, %s10, %s8
  %12 = sst [smem:[#allocation2]] %s6
  $region1: #{tpu_custom_call.1} parent=0
    #allocation3 [shape = 'u8[512]{0}', space=vmem, size = 0x400, scoped, tag = 'output window, operand 0, single buffered']
    #allocation4 [shape = 's32[1]{0}', space=sflag, size = 0x4, scoped, tag = 'scoped memory for tpu_custom_call.1']
    %13 = vsyncpa [#allocation4], 0
    // Predicated region
    $region2: #{tpu_custom_call.1} parent=1 // pred_check
      _
    $region3: #{tpu_custom_call.1} parent=1 // pred_check_branch
      %15 = sbr.rel (0) target = $region5
    $region4: #{tpu_custom_call.1} parent=1 // pred_region
      _
    $region5: #{tpu_custom_call.1} parent=1 // pred_fallthru
      _
    // Predicated region
    $region6: #{tpu_custom_call.1} parent=1 // pred_check
      _
    $region7: #{tpu_custom_call.1} parent=1 // pred_check_branch
      %17 = sbr.rel (0) target = $region9
    $region8: #{tpu_custom_call.1} parent=1 // pred_region
      _
    $region9: #{tpu_custom_call.1} parent=1 // pred_fallthru
      _
    // Predicated region
    $region10: #{tpu_custom_call.1} parent=1 // pred_check
      _
    $region11: #{tpu_custom_call.1} parent=1 // pred_check_branch
      %19 = sbr.rel (0) target = $region13
    $region12: #{tpu_custom_call.1} parent=1 // pred_region
      _
    $region13: #{tpu_custom_call.1} parent=1 // pred_fallthru
      _
    // Predicated region
    $region14: #{tpu_custom_call.1} parent=1 // pred_check
      _
    $region15: #{tpu_custom_call.1} parent=1 // pred_check_branch
      %21 = sbr.rel (0) target = $region17
    $region16: #{tpu_custom_call.1} parent=1 // pred_region
      _
    $region17: #{tpu_custom_call.1} parent=1 // pred_fallthru
      _
    // Predicated region
    $region18: #{tpu_custom_call.1} parent=1 // pred_check
      _
    $region19: #{tpu_custom_call.1} parent=1 // pred_check_branch
      %23 = sbr.rel (0) target = $region21
    $region20: #{tpu_custom_call.1} parent=1 // pred_region
      _
    $region21: #{tpu_custom_call.1} parent=1 // pred_fallthru
      _
    // Predicated region
    $region22: #{tpu_custom_call.1} parent=1 // pred_check
      _
    $region23: #{tpu_custom_call.1} parent=1 // pred_check_branch
      %25 = sbr.rel (0) target = $region25
    $region24: #{tpu_custom_call.1} parent=1 // pred_region
      _
    $region25: #{tpu_custom_call.1} parent=1 // pred_fallthru
      _
    // Predicated region
    $region26: #{tpu_custom_call.1} parent=1 // pred_check
      _
    $region27: #{tpu_custom_call.1} parent=1 // pred_check_branch
      %27 = sbr.rel (0) target = $region29
    $region28: #{tpu_custom_call.1} parent=1 // pred_region
      _
    $region29: #{tpu_custom_call.1} parent=1 // pred_fallthru
      _
    %v29 = vld [vmem:[%s0] sm:$0xf]
    %v30 = vld [vmem:[%s0 + $0x4] sm:$0xf]
    %v31 = vld [vmem:[%s0 + $0x8] sm:$0xf]
    %v32 = vld [vmem:[%s0 + $0xc] sm:$0xf]
    %v33 = vld [vmem:[%s0 + $0x10] sm:$0xf]
    %v34 = vld [vmem:[%s0 + $0x14] sm:$0xf]
    %v35 = vld [vmem:[%s0 + $0x18] sm:$0xf]
    %v36 = vld [vmem:[%s0 + $0x1c] sm:$0xf]
    %v37 = vld [vmem:[%s0 + $0x20] sm:$0xf]
    %v38 = vld [vmem:[%s0 + $0x24] sm:$0xf]
    %v39 = vld [vmem:[%s0 + $0x28] sm:$0xf]
    %v40 = vld [vmem:[%s0 + $0x2c] sm:$0xf]
    %v41 = vld [vmem:[%s0 + $0x30] sm:$0xf]
    %v42 = vld [vmem:[%s0 + $0x34] sm:$0xf]
    %v43 = vld [vmem:[%s0 + $0x38] sm:$0xf]
    %v44 = vld [vmem:[%s0 + $0x3c] sm:$0xf]
    %v45 = vld [vmem:[%s1] sm:$0xf]
    %v46 = vld [vmem:[%s1 + $0x4] sm:$0xf]
    %v47 = vld [vmem:[%s2] sm:$0x1]
    %v49 = vlaneseq
    %v50 = vshrl.u32 %v49, 7
    %v51 = vsub.s32 0, %v50
    %v52 = vrot.slane %v47, %v51
    %v70 = vunpack.c.l.b16 %v29
    %v71 = vunpack.c.l.b16 %v30
    %v72 = vunpack.c.l.b16 %v31
    %v73 = vunpack.c.l.b16 %v32
    %v74 = vunpack.c.l.b16 %v33
    %v75 = vunpack.c.l.b16 %v34
    %v76 = vunpack.c.l.b16 %v35
    %v77 = vunpack.c.l.b16 %v36
    %v78 = vunpack.c.l.b16 %v37
    %v79 = vunpack.c.l.b16 %v38
    %v80 = vunpack.c.l.b16 %v39
    %v81 = vunpack.c.l.b16 %v40
    %v82 = vunpack.c.l.b16 %v41
    %v83 = vunpack.c.l.b16 %v42
    %v84 = vunpack.c.l.b16 %v43
    %v85 = vunpack.c.l.b16 %v44
    %v86 = vpack.c.b16 %v71, %v70
    %v87 = vpack.c.b16 %v73, %v72
    %v88 = vpack.c.b16 %v75, %v74
    %v89 = vpack.c.b16 %v77, %v76
    %v90 = vpack.c.b16 %v79, %v78
    %v91 = vpack.c.b16 %v81, %v80
    %v92 = vpack.c.b16 %v83, %v82
    %v93 = vpack.c.b16 %v85, %v84
    %v96 = vunpack.c.l.b16 %v45
    %v97 = vunpack.c.l.b16 %v46
    %v98 = vpack.c.b16 %v97, %v96
    %vm100 = vcmask 130048
    %v102 = vsel %vm100, %v86, 0
    %v105 = vsel %vm100, %v87, 0
    %v108 = vsel %vm100, %v88, 0
    %v111 = vsel %vm100, %v89, 0
    %v114 = vsel %vm100, %v90, 0
    %v117 = vsel %vm100, %v91, 0
    %v120 = vsel %vm100, %v92, 0
    %v123 = vsel %vm100, %v93, 0
    %125 = vmatprep.subr.bf16.mxu0 0
    %126 = vmatpush1.bf16.msra.mxu0 %v98
    %127 = vmatprep.subr.bf16.mxu0 0
    %128 = vmatpush1.bf16.msra.mxu0 0
    %129 = vmatprep.subr.bf16.mxu0 0
    %130 = vmatpush1.bf16.msra.mxu0 0
    %131 = vmatprep.subr.bf16.mxu0 0
    %132 = vmatpush1.bf16.msra.mxu0 0
    %133 = vmatprep.subr.bf16.mxu0 0
    %134 = vmatpush1.bf16.msra.mxu0 0
    %135 = vmatprep.subr.bf16.mxu0 0
    %136 = vmatpush1.bf16.msra.mxu0 0
    %137 = vmatprep.subr.bf16.mxu0 0
    %138 = vmatpush1.bf16.msra.mxu0 0
    %139 = vmatprep.subr.bf16.mxu0 0
    %140 = vmatpush1.bf16.msra.mxu0 0
    %141 = vmatprep.subr.bf16.mxu0 0
    %142 = vmatpush1.bf16.msra.mxu0 0
    %143 = vmatprep.subr.bf16.mxu0 0
    %144 = vmatpush1.bf16.msra.mxu0 0
    %145 = vmatprep.subr.bf16.mxu0 0
    %146 = vmatpush1.bf16.msra.mxu0 0
    %147 = vmatprep.subr.bf16.mxu0 0
    %148 = vmatpush1.bf16.msra.mxu0 0
    %149 = vmatprep.subr.bf16.mxu0 0
    %150 = vmatpush1.bf16.msra.mxu0 0
    %151 = vmatprep.subr.bf16.mxu0 0
    %152 = vmatpush1.bf16.msra.mxu0 0
    %153 = vmatprep.subr.bf16.mxu0 0
    %154 = vmatpush1.bf16.msra.mxu0 0
    %155 = vmatprep.subr.bf16.mxu0 0
    %156 = vmatpush1.bf16.msra.mxu0 0
    %157 = vmatprep.mubr.bf16.mxu0 0
    %158 = vmatmul.mubr.bf16.gmra.mrb[0].mxu0 %v102
    %v159 = vpop.f32.mrb[0].mxu0
    %v160 = vadd.f32 %v52, %v159
    %v161 = vpop.f32.mrb[0].mxu0
    %v162 = vpop.f32.mrb[0].mxu0
    %v163 = vadd.f32 %v52, %v162
    %v164 = vpop.f32.mrb[0].mxu0
    %165 = vmatprep.mubr.bf16.mxu0 0
    %166 = vmatmul.mubr.bf16.gmra.mrb[0].mxu0 %v105
    %v167 = vpop.f32.mrb[0].mxu0
    %v168 = vadd.f32 %v52, %v167
    %v169 = vpop.f32.mrb[0].mxu0
    %v170 = vpop.f32.mrb[0].mxu0
    %v171 = vadd.f32 %v52, %v170
    %v172 = vpop.f32.mrb[0].mxu0
    %173 = vmatprep.mubr.bf16.mxu0 0
    %174 = vmatmul.mubr.bf16.gmra.mrb[0].mxu0 %v108
    %v175 = vpop.f32.mrb[0].mxu0
    %v176 = vadd.f32 %v52, %v175
    %v177 = vpop.f32.mrb[0].mxu0
    %v178 = vpop.f32.mrb[0].mxu0
    %v179 = vadd.f32 %v52, %v178
    %v180 = vpop.f32.mrb[0].mxu0
    %181 = vmatprep.mubr.bf16.mxu0 0
    %182 = vmatmul.mubr.bf16.gmra.mrb[0].mxu0 %v111
    %v183 = vpop.f32.mrb[0].mxu0
    %v184 = vadd.f32 %v52, %v183
    %v185 = vpop.f32.mrb[0].mxu0
    %v186 = vpop.f32.mrb[0].mxu0
    %v187 = vadd.f32 %v52, %v186
    %v188 = vpop.f32.mrb[0].mxu0
    %189 = vmatprep.mubr.bf16.mxu0 0
    %190 = vmatmul.mubr.bf16.gmra.mrb[0].mxu0 %v114
    %v191 = vpop.f32.mrb[0].mxu0
    %v192 = vadd.f32 %v52, %v191
    %v193 = vpop.f32.mrb[0].mxu0
    %v194 = vpop.f32.mrb[0].mxu0
    %v195 = vadd.f32 %v52, %v194
    %v196 = vpop.f32.mrb[0].mxu0
    %197 = vmatprep.mubr.bf16.mxu0 0
    %198 = vmatmul.mubr.bf16.gmra.mrb[0].mxu0 %v117
    %v199 = vpop.f32.mrb[0].mxu0
    %v200 = vadd.f32 %v52, %v199
    %v201 = vpop.f32.mrb[0].mxu0
    %v202 = vpop.f32.mrb[0].mxu0
    %v203 = vadd.f32 %v52, %v202
    %v204 = vpop.f32.mrb[0].mxu0
    %205 = vmatprep.mubr.bf16.mxu0 0
    %206 = vmatmul.mubr.bf16.gmra.mrb[0].mxu0 %v120
    %v207 = vpop.f32.mrb[0].mxu0
    %v208 = vadd.f32 %v52, %v207
    %v209 = vpop.f32.mrb[0].mxu0
    %v210 = vpop.f32.mrb[0].mxu0
    %v211 = vadd.f32 %v52, %v210
    %v212 = vpop.f32.mrb[0].mxu0
    %213 = vmatprep.mubr.bf16.mxu0 0
    %214 = vmatmul.mubr.bf16.gmra.mrb[0].mxu0 %v123
    %v215 = vpop.f32.mrb[0].mxu0
    %v216 = vadd.f32 %v52, %v215
    %v217 = vpop.f32.mrb[0].mxu0
    %v218 = vpop.f32.mrb[0].mxu0
    %v219 = vadd.f32 %v52, %v218
    %v220 = vpop.f32.mrb[0].mxu0
    %221 = vdwg.mxu0
    %vm222 = vcmp.gt.f32.partialorder %v160, 0.0
    %vm223 = vcmp.gt.f32.partialorder %v163, 0.0
    %vm224 = vcmp.gt.f32.partialorder %v168, 0.0
    %vm225 = vcmp.gt.f32.partialorder %v171, 0.0
    %vm226 = vcmp.gt.f32.partialorder %v176, 0.0
    %vm227 = vcmp.gt.f32.partialorder %v179, 0.0
    %vm228 = vcmp.gt.f32.partialorder %v184, 0.0
    %vm229 = vcmp.gt.f32.partialorder %v187, 0.0
    %vm230 = vcmp.gt.f32.partialorder %v192, 0.0
    %vm231 = vcmp.gt.f32.partialorder %v195, 0.0
    %vm232 = vcmp.gt.f32.partialorder %v200, 0.0
    %vm233 = vcmp.gt.f32.partialorder %v203, 0.0
    %vm234 = vcmp.gt.f32.partialorder %v208, 0.0
    %vm235 = vcmp.gt.f32.partialorder %v211, 0.0
    %vm236 = vcmp.gt.f32.partialorder %v216, 0.0
    %vm237 = vcmp.gt.f32.partialorder %v219, 0.0
    %v238 = vmul.f32 %v160, 0.2
    %v239 = vmul.f32 %v163, 0.2
    %v240 = vmul.f32 %v168, 0.2
    %v241 = vmul.f32 %v171, 0.2
    %v242 = vmul.f32 %v176, 0.2
    %v243 = vmul.f32 %v179, 0.2
    %v244 = vmul.f32 %v184, 0.2
    %v245 = vmul.f32 %v187, 0.2
    %v246 = vmul.f32 %v192, 0.2
    %v247 = vmul.f32 %v195, 0.2
    %v248 = vmul.f32 %v200, 0.2
    %v249 = vmul.f32 %v203, 0.2
    %v250 = vmul.f32 %v208, 0.2
    %v251 = vmul.f32 %v211, 0.2
    %v252 = vmul.f32 %v216, 0.2
    %v253 = vmul.f32 %v219, 0.2
    %v254 = vsel %vm222, %v160, %v238
    %v255 = vsel %vm223, %v163, %v239
    %v256 = vsel %vm224, %v168, %v240
    %v257 = vsel %vm225, %v171, %v241
    %v258 = vsel %vm226, %v176, %v242
    %v259 = vsel %vm227, %v179, %v243
    %v260 = vsel %vm228, %v184, %v244
    %v261 = vsel %vm229, %v187, %v245
    %v262 = vsel %vm230, %v192, %v246
    %v263 = vsel %vm231, %v195, %v247
    %v264 = vsel %vm232, %v200, %v248
    %v265 = vsel %vm233, %v203, %v249
    %v266 = vsel %vm234, %v208, %v250
    %v267 = vsel %vm235, %v211, %v251
    %v268 = vsel %vm236, %v216, %v252
    %v269 = vsel %vm237, %v219, %v253
    %v270 = vld [vmem:[%s3] sm:$0xff]
    %v271 = vld [vmem:[%s3 + $0x8] sm:$0xff]
    %v272 = vld [vmem:[%s3 + $0x10] sm:$0xff]
    %v273 = vld [vmem:[%s3 + $0x18] sm:$0xff]
    %v274 = vld [vmem:[%s3 + $0x20] sm:$0xff]
    %v275 = vld [vmem:[%s3 + $0x28] sm:$0xff]
    %v276 = vld [vmem:[%s3 + $0x30] sm:$0xff]
    %v277 = vld [vmem:[%s3 + $0x38] sm:$0xff]
    %v278 = vld [vmem:[%s4] sm:$0x1]
    %v280 = vlaneseq
    %v281 = vshrl.u32 %v280, 7
    %v282 = vsub.s32 0, %v281
    %v283 = vrot.slane %v278, %v282
    %vm285 = vcmask 523264
    %v287 = vsel %vm285, %v254, 0
    %v290 = vsel %vm285, %v255, 0
    %v293 = vsel %vm285, %v256, 0
    %v296 = vsel %vm285, %v257, 0
    %v299 = vsel %vm285, %v258, 0
    %v302 = vsel %vm285, %v259, 0
    %v305 = vsel %vm285, %v260, 0
    %v308 = vsel %vm285, %v261, 0
    %v311 = vsel %vm285, %v262, 0
    %v314 = vsel %vm285, %v263, 0
    %v317 = vsel %vm285, %v264, 0
    %v320 = vsel %vm285, %v265, 0
    %v323 = vsel %vm285, %v266, 0
    %v326 = vsel %vm285, %v267, 0
    %v329 = vsel %vm285, %v268, 0
    %v332 = vsel %vm285, %v269, 0
    %334 = vmatprep.subr.mxu0 0.0
    %335 = vmatpush1.msra.mxu0 %v270
    %336 = vmatprep.subr.mxu0 0.0
    %337 = vmatpush1.msra.mxu0 %v271
    %338 = vmatprep.subr.mxu0 0.0
    %339 = vmatpush1.msra.mxu0 %v272
    %340 = vmatprep.subr.mxu0 0.0
    %341 = vmatpush1.msra.mxu0 %v273
    %342 = vmatprep.subr.mxu0 0.0
    %343 = vmatpush1.msra.mxu0 %v274
    %344 = vmatprep.subr.mxu0 0.0
    %345 = vmatpush1.msra.mxu0 %v275
    %346 = vmatprep.subr.mxu0 0.0
    %347 = vmatpush1.msra.mxu0 %v276
    %348 = vmatprep.subr.mxu0 0.0
    %349 = vmatpush1.msra.mxu0 %v277
    %350 = vmatprep.subr.mxu0 0.0
    %351 = vmatpush1.msra.mxu0 0.0
    %352 = vmatprep.subr.mxu0 0.0
    %353 = vmatpush1.msra.mxu0 0.0
    %354 = vmatprep.subr.mxu0 0.0
    %355 = vmatpush1.msra.mxu0 0.0
    %356 = vmatprep.subr.mxu0 0.0
    %357 = vmatpush1.msra.mxu0 0.0
    %358 = vmatprep.subr.mxu0 0.0
    %359 = vmatpush1.msra.mxu0 0.0
    %360 = vmatprep.subr.mxu0 0.0
    %361 = vmatpush1.msra.mxu0 0.0
    %362 = vmatprep.subr.mxu0 0.0
    %363 = vmatpush1.msra.mxu0 0.0
    %364 = vmatprep.subr.mxu0 0.0
    %365 = vmatpush1.msra.mxu0 0.0
    %366 = vmatprep.subr.mxu0 0.0
    %367 = vmatpush1.msra.mxu0 0.0
    %368 = vmatprep.subr.mxu0 0.0
    %369 = vmatpush1.msra.mxu0 0.0
    %370 = vmatprep.subr.mxu0 0.0
    %371 = vmatpush1.msra.mxu0 0.0
    %372 = vmatprep.subr.mxu0 0.0
    %373 = vmatpush1.msra.mxu0 0.0
    %374 = vmatprep.subr.mxu0 0.0
    %375 = vmatpush1.msra.mxu0 0.0
    %376 = vmatprep.subr.mxu0 0.0
    %377 = vmatpush1.msra.mxu0 0.0
    %378 = vmatprep.subr.mxu0 0.0
    %379 = vmatpush1.msra.mxu0 0.0
    %380 = vmatprep.subr.mxu0 0.0
    %381 = vmatpush1.msra.mxu0 0.0
    %382 = vmatprep.subr.mxu0 0.0
    %383 = vmatpush1.msra.mxu0 0.0
    %384 = vmatprep.subr.mxu0 0.0
    %385 = vmatpush1.msra.mxu0 0.0
    %386 = vmatprep.subr.mxu0 0.0
    %387 = vmatpush1.msra.mxu0 0.0
    %388 = vmatprep.subr.mxu0 0.0
    %389 = vmatpush1.msra.mxu0 0.0
    %390 = vmatprep.subr.mxu0 0.0
    %391 = vmatpush1.msra.mxu0 0.0
    %392 = vmatprep.subr.mxu0 0.0
    %393 = vmatpush1.msra.mxu0 0.0
    %394 = vmatprep.subr.mxu0 0.0
    %395 = vmatpush1.msra.mxu0 0.0
    %396 = vmatprep.subr.mxu0 0.0
    %397 = vmatpush1.msra.mxu0 0.0
    %398 = vmatprep.mubr.f32.mxu0 0.0
    %399 = vmatmul.mubr.f32.gmra.mrb[0].mxu0 %v287
    %v400 = vpop.f32.mrb[0].mxu0
    %v401 = vadd.f32 %v283, %v400
    %v402 = vpop.f32.mrb[0].mxu0
    %403 = vmatprep.mubr.f32.mxu0 0.0
    %404 = vmatmul.mubr.f32.gmra.mrb[0].mxu0 %v290
    %v405 = vpop.f32.mrb[0].mxu0
    %v406 = vadd.f32 %v283, %v405
    %v407 = vpop.f32.mrb[0].mxu0
    %408 = vmatprep.mubr.f32.mxu0 0.0
    %409 = vmatmul.mubr.f32.gmra.mrb[0].mxu0 %v293
    %v410 = vpop.f32.mrb[0].mxu0
    %v411 = vadd.f32 %v283, %v410
    %v412 = vpop.f32.mrb[0].mxu0
    %413 = vmatprep.mubr.f32.mxu0 0.0
    %414 = vmatmul.mubr.f32.gmra.mrb[0].mxu0 %v296
    %v415 = vpop.f32.mrb[0].mxu0
    %v416 = vadd.f32 %v283, %v415
    %v417 = vpop.f32.mrb[0].mxu0
    %418 = vmatprep.mubr.f32.mxu0 0.0
    %419 = vmatmul.mubr.f32.gmra.mrb[0].mxu0 %v299
    %v420 = vpop.f32.mrb[0].mxu0
    %v421 = vadd.f32 %v283, %v420
    %v422 = vpop.f32.mrb[0].mxu0
    %423 = vmatprep.mubr.f32.mxu0 0.0
    %424 = vmatmul.mubr.f32.gmra.mrb[0].mxu0 %v302
    %v425 = vpop.f32.mrb[0].mxu0
    %v426 = vadd.f32 %v283, %v425
    %v427 = vpop.f32.mrb[0].mxu0
    %428 = vmatprep.mubr.f32.mxu0 0.0
    %429 = vmatmul.mubr.f32.gmra.mrb[0].mxu0 %v305
    %v430 = vpop.f32.mrb[0].mxu0
    %v431 = vadd.f32 %v283, %v430
    %v432 = vpop.f32.mrb[0].mxu0
    %433 = vmatprep.mubr.f32.mxu0 0.0
    %434 = vmatmul.mubr.f32.gmra.mrb[0].mxu0 %v308
    %v435 = vpop.f32.mrb[0].mxu0
    %v436 = vadd.f32 %v283, %v435
    %v437 = vpop.f32.mrb[0].mxu0
    %438 = vmatprep.mubr.f32.mxu0 0.0
    %439 = vmatmul.mubr.f32.gmra.mrb[0].mxu0 %v311
    %v440 = vpop.f32.mrb[0].mxu0
    %v441 = vadd.f32 %v283, %v440
    %v442 = vpop.f32.mrb[0].mxu0
    %443 = vmatprep.mubr.f32.mxu0 0.0
    %444 = vmatmul.mubr.f32.gmra.mrb[0].mxu0 %v314
    %v445 = vpop.f32.mrb[0].mxu0
    %v446 = vadd.f32 %v283, %v445
    %v447 = vpop.f32.mrb[0].mxu0
    %448 = vmatprep.mubr.f32.mxu0 0.0
    %449 = vmatmul.mubr.f32.gmra.mrb[0].mxu0 %v317
    %v450 = vpop.f32.mrb[0].mxu0
    %v451 = vadd.f32 %v283, %v450
    %v452 = vpop.f32.mrb[0].mxu0
    %453 = vmatprep.mubr.f32.mxu0 0.0
    %454 = vmatmul.mubr.f32.gmra.mrb[0].mxu0 %v320
    %v455 = vpop.f32.mrb[0].mxu0
    %v456 = vadd.f32 %v283, %v455
    %v457 = vpop.f32.mrb[0].mxu0
    %458 = vmatprep.mubr.f32.mxu0 0.0
    %459 = vmatmul.mubr.f32.gmra.mrb[0].mxu0 %v323
    %v460 = vpop.f32.mrb[0].mxu0
    %v461 = vadd.f32 %v283, %v460
    %v462 = vpop.f32.mrb[0].mxu0
    %463 = vmatprep.mubr.f32.mxu0 0.0
    %464 = vmatmul.mubr.f32.gmra.mrb[0].mxu0 %v326
    %v465 = vpop.f32.mrb[0].mxu0
    %v466 = vadd.f32 %v283, %v465
    %v467 = vpop.f32.mrb[0].mxu0
    %468 = vmatprep.mubr.f32.mxu0 0.0
    %469 = vmatmul.mubr.f32.gmra.mrb[0].mxu0 %v329
    %v470 = vpop.f32.mrb[0].mxu0
    %v471 = vadd.f32 %v283, %v470
    %v472 = vpop.f32.mrb[0].mxu0
    %473 = vmatprep.mubr.f32.mxu0 0.0
    %474 = vmatmul.mubr.f32.gmra.mrb[0].mxu0 %v332
    %v475 = vpop.f32.mrb[0].mxu0
    %v476 = vadd.f32 %v283, %v475
    %v477 = vpop.f32.mrb[0].mxu0
    %478 = vdwg.mxu0
    %vm479 = vcmp.gt.f32.partialorder %v401, 0.0
    %vm480 = vcmp.gt.f32.partialorder %v406, 0.0
    %vm481 = vcmp.gt.f32.partialorder %v411, 0.0
    %vm482 = vcmp.gt.f32.partialorder %v416, 0.0
    %vm483 = vcmp.gt.f32.partialorder %v421, 0.0
    %vm484 = vcmp.gt.f32.partialorder %v426, 0.0
    %vm485 = vcmp.gt.f32.partialorder %v431, 0.0
    %vm486 = vcmp.gt.f32.partialorder %v436, 0.0
    %vm487 = vcmp.gt.f32.partialorder %v441, 0.0
    %vm488 = vcmp.gt.f32.partialorder %v446, 0.0
    %vm489 = vcmp.gt.f32.partialorder %v451, 0.0
    %vm490 = vcmp.gt.f32.partialorder %v456, 0.0
    %vm491 = vcmp.gt.f32.partialorder %v461, 0.0
    %vm492 = vcmp.gt.f32.partialorder %v466, 0.0
    %vm493 = vcmp.gt.f32.partialorder %v471, 0.0
    %vm494 = vcmp.gt.f32.partialorder %v476, 0.0
    %v495 = vmul.f32 %v401, 0.2
    %v496 = vmul.f32 %v406, 0.2
    %v497 = vmul.f32 %v411, 0.2
    %v498 = vmul.f32 %v416, 0.2
    %v499 = vmul.f32 %v421, 0.2
    %v500 = vmul.f32 %v426, 0.2
    %v501 = vmul.f32 %v431, 0.2
    %v502 = vmul.f32 %v436, 0.2
    %v503 = vmul.f32 %v441, 0.2
    %v504 = vmul.f32 %v446, 0.2
    %v505 = vmul.f32 %v451, 0.2
    %v506 = vmul.f32 %v456, 0.2
    %v507 = vmul.f32 %v461, 0.2
    %v508 = vmul.f32 %v466, 0.2
    %v509 = vmul.f32 %v471, 0.2
    %v510 = vmul.f32 %v476, 0.2
    %v511 = vsel %vm479, %v401, %v495
    %v512 = vsel %vm480, %v406, %v496
    %v513 = vsel %vm481, %v411, %v497
    %v514 = vsel %vm482, %v416, %v498
    %v515 = vsel %vm483, %v421, %v499
    %v516 = vsel %vm484, %v426, %v500
    %v517 = vsel %vm485, %v431, %v501
    %v518 = vsel %vm486, %v436, %v502
    %v519 = vsel %vm487, %v441, %v503
    %v520 = vsel %vm488, %v446, %v504
    %v521 = vsel %vm489, %v451, %v505
    %v522 = vsel %vm490, %v456, %v506
    %v523 = vsel %vm491, %v461, %v507
    %v524 = vsel %vm492, %v466, %v508
    %v525 = vsel %vm493, %v471, %v509
    %v526 = vsel %vm494, %v476, %v510
    %v527 = vld [vmem:[%s5] sm:$0xff]
    %v528 = vld [vmem:[%s5 + $0x8] sm:$0xff]
    %v529 = vld [vmem:[%s5 + $0x10] sm:$0xff]
    %v530 = vld [vmem:[%s5 + $0x18] sm:$0xff]
    %v531 = vld [vmem:[%s5 + $0x20] sm:$0xff]
    %v532 = vld [vmem:[%s5 + $0x28] sm:$0xff]
    %v533 = vld [vmem:[%s5 + $0x30] sm:$0xff]
    %v534 = vld [vmem:[%s5 + $0x38] sm:$0xff]
    %v536 = vsel %vm285, %v511, 0
    %v539 = vsel %vm285, %v512, 0
    %v542 = vsel %vm285, %v513, 0
    %v545 = vsel %vm285, %v514, 0
    %v548 = vsel %vm285, %v515, 0
    %v551 = vsel %vm285, %v516, 0
    %v554 = vsel %vm285, %v517, 0
    %v557 = vsel %vm285, %v518, 0
    %v560 = vsel %vm285, %v519, 0
    %v563 = vsel %vm285, %v520, 0
    %v566 = vsel %vm285, %v521, 0
    %v569 = vsel %vm285, %v522, 0
    %v572 = vsel %vm285, %v523, 0
    %v575 = vsel %vm285, %v524, 0
    %v578 = vsel %vm285, %v525, 0
    %v581 = vsel %vm285, %v526, 0
    %583 = vmatprep.subr.mxu0 0.0
    %584 = vmatpush1.msra.mxu0 %v527
    %585 = vmatprep.subr.mxu0 0.0
    %586 = vmatpush1.msra.mxu0 %v528
    %587 = vmatprep.subr.mxu0 0.0
    %588 = vmatpush1.msra.mxu0 %v529
    %589 = vmatprep.subr.mxu0 0.0
    %590 = vmatpush1.msra.mxu0 %v530
    %591 = vmatprep.subr.mxu0 0.0
    %592 = vmatpush1.msra.mxu0 %v531
    %593 = vmatprep.subr.mxu0 0.0
    %594 = vmatpush1.msra.mxu0 %v532
    %595 = vmatprep.subr.mxu0 0.0
    %596 = vmatpush1.msra.mxu0 %v533
    %597 = vmatprep.subr.mxu0 0.0
    %598 = vmatpush1.msra.mxu0 %v534
    %599 = vmatprep.subr.mxu0 0.0
    %600 = vmatpush1.msra.mxu0 0.0
    %601 = vmatprep.subr.mxu0 0.0
    %602 = vmatpush1.msra.mxu0 0.0
    %603 = vmatprep.subr.mxu0 0.0
    %604 = vmatpush1.msra.mxu0 0.0
    %605 = vmatprep.subr.mxu0 0.0
    %606 = vmatpush1.msra.mxu0 0.0
    %607 = vmatprep.subr.mxu0 0.0
    %608 = vmatpush1.msra.mxu0 0.0
    %609 = vmatprep.subr.mxu0 0.0
    %610 = vmatpush1.msra.mxu0 0.0
    %611 = vmatprep.subr.mxu0 0.0
    %612 = vmatpush1.msra.mxu0 0.0
    %613 = vmatprep.subr.mxu0 0.0
    %614 = vmatpush1.msra.mxu0 0.0
    %615 = vmatprep.subr.mxu0 0.0
    %616 = vmatpush1.msra.mxu0 0.0
    %617 = vmatprep.subr.mxu0 0.0
    %618 = vmatpush1.msra.mxu0 0.0
    %619 = vmatprep.subr.mxu0 0.0
    %620 = vmatpush1.msra.mxu0 0.0
    %621 = vmatprep.subr.mxu0 0.0
    %622 = vmatpush1.msra.mxu0 0.0
    %623 = vmatprep.subr.mxu0 0.0
    %624 = vmatpush1.msra.mxu0 0.0
    %625 = vmatprep.subr.mxu0 0.0
    %626 = vmatpush1.msra.mxu0 0.0
    %627 = vmatprep.subr.mxu0 0.0
    %628 = vmatpush1.msra.mxu0 0.0
    %629 = vmatprep.subr.mxu0 0.0
    %630 = vmatpush1.msra.mxu0 0.0
    %631 = vmatprep.subr.mxu0 0.0
    %632 = vmatpush1.msra.mxu0 0.0
    %633 = vmatprep.subr.mxu0 0.0
    %634 = vmatpush1.msra.mxu0 0.0
    %635 = vmatprep.subr.mxu0 0.0
    %636 = vmatpush1.msra.mxu0 0.0
    %637 = vmatprep.subr.mxu0 0.0
    %638 = vmatpush1.msra.mxu0 0.0
    %639 = vmatprep.subr.mxu0 0.0
    %640 = vmatpush1.msra.mxu0 0.0
    %641 = vmatprep.subr.mxu0 0.0
    %642 = vmatpush1.msra.mxu0 0.0
    %643 = vmatprep.subr.mxu0 0.0
    %644 = vmatpush1.msra.mxu0 0.0
    %645 = vmatprep.subr.mxu0 0.0
    %646 = vmatpush1.msra.mxu0 0.0
    %647 = vmatprep.mubr.f32.mxu0 0.0
    %648 = vmatmul.mubr.f32.gmra.mrb[0].mxu0 %v536
    %v649 = vpop.f32.mrb[0].mxu0
    %v650 = vadd.f32 0.0, %v649
    %v651 = vpop.f32.mrb[0].mxu0
    %652 = vmatprep.mubr.f32.mxu0 0.0
    %653 = vmatmul.mubr.f32.gmra.mrb[0].mxu0 %v539
    %v654 = vpop.f32.mrb[0].mxu0
    %v655 = vadd.f32 0.0, %v654
    %v656 = vpop.f32.mrb[0].mxu0
    %657 = vmatprep.mubr.f32.mxu0 0.0
    %658 = vmatmul.mubr.f32.gmra.mrb[0].mxu0 %v542
    %v659 = vpop.f32.mrb[0].mxu0
    %v660 = vadd.f32 0.0, %v659
    %v661 = vpop.f32.mrb[0].mxu0
    %662 = vmatprep.mubr.f32.mxu0 0.0
    %663 = vmatmul.mubr.f32.gmra.mrb[0].mxu0 %v545
    %v664 = vpop.f32.mrb[0].mxu0
    %v665 = vadd.f32 0.0, %v664
    %v666 = vpop.f32.mrb[0].mxu0
    %667 = vmatprep.mubr.f32.mxu0 0.0
    %668 = vmatmul.mubr.f32.gmra.mrb[0].mxu0 %v548
    %v669 = vpop.f32.mrb[0].mxu0
    %v670 = vadd.f32 0.0, %v669
    %v671 = vpop.f32.mrb[0].mxu0
    %672 = vmatprep.mubr.f32.mxu0 0.0
    %673 = vmatmul.mubr.f32.gmra.mrb[0].mxu0 %v551
    %v674 = vpop.f32.mrb[0].mxu0
    %v675 = vadd.f32 0.0, %v674
    %v676 = vpop.f32.mrb[0].mxu0
    %677 = vmatprep.mubr.f32.mxu0 0.0
    %678 = vmatmul.mubr.f32.gmra.mrb[0].mxu0 %v554
    %v679 = vpop.f32.mrb[0].mxu0
    %v680 = vadd.f32 0.0, %v679
    %v681 = vpop.f32.mrb[0].mxu0
    %682 = vmatprep.mubr.f32.mxu0 0.0
    %683 = vmatmul.mubr.f32.gmra.mrb[0].mxu0 %v557
    %v684 = vpop.f32.mrb[0].mxu0
    %v685 = vadd.f32 0.0, %v684
    %v686 = vpop.f32.mrb[0].mxu0
    %687 = vmatprep.mubr.f32.mxu0 0.0
    %688 = vmatmul.mubr.f32.gmra.mrb[0].mxu0 %v560
    %v689 = vpop.f32.mrb[0].mxu0
    %v690 = vadd.f32 0.0, %v689
    %v691 = vpop.f32.mrb[0].mxu0
    %692 = vmatprep.mubr.f32.mxu0 0.0
    %693 = vmatmul.mubr.f32.gmra.mrb[0].mxu0 %v563
    %v694 = vpop.f32.mrb[0].mxu0
    %v695 = vadd.f32 0.0, %v694
    %v696 = vpop.f32.mrb[0].mxu0
    %697 = vmatprep.mubr.f32.mxu0 0.0
    %698 = vmatmul.mubr.f32.gmra.mrb[0].mxu0 %v566
    %v699 = vpop.f32.mrb[0].mxu0
    %v700 = vadd.f32 0.0, %v699
    %v701 = vpop.f32.mrb[0].mxu0
    %702 = vmatprep.mubr.f32.mxu0 0.0
    %703 = vmatmul.mubr.f32.gmra.mrb[0].mxu0 %v569
    %v704 = vpop.f32.mrb[0].mxu0
    %v705 = vadd.f32 0.0, %v704
    %v706 = vpop.f32.mrb[0].mxu0
    %707 = vmatprep.mubr.f32.mxu0 0.0
    %708 = vmatmul.mubr.f32.gmra.mrb[0].mxu0 %v572
    %v709 = vpop.f32.mrb[0].mxu0
    %v710 = vadd.f32 0.0, %v709
    %v711 = vpop.f32.mrb[0].mxu0
    %712 = vmatprep.mubr.f32.mxu0 0.0
    %713 = vmatmul.mubr.f32.gmra.mrb[0].mxu0 %v575
    %v714 = vpop.f32.mrb[0].mxu0
    %v715 = vadd.f32 0.0, %v714
    %v716 = vpop.f32.mrb[0].mxu0
    %717 = vmatprep.mubr.f32.mxu0 0.0
    %718 = vmatmul.mubr.f32.gmra.mrb[0].mxu0 %v578
    %v719 = vpop.f32.mrb[0].mxu0
    %v720 = vadd.f32 0.0, %v719
    %v721 = vpop.f32.mrb[0].mxu0
    %722 = vmatprep.mubr.f32.mxu0 0.0
    %723 = vmatmul.mubr.f32.gmra.mrb[0].mxu0 %v581
    %v724 = vpop.f32.mrb[0].mxu0
    %v725 = vadd.f32 0.0, %v724
    %v726 = vpop.f32.mrb[0].mxu0
    %727 = vdwg.mxu0
    %728 = vxpose.xlu0.b32.start [1/16] %v650, 128
    %729 = vxpose.xlu0.b32.cont [2/16] %v655, 128
    %730 = vxpose.xlu0.b32.cont [3/16] %v660, 128
    %731 = vxpose.xlu0.b32.cont [4/16] %v665, 128
    %732 = vxpose.xlu0.b32.cont [5/16] %v670, 128
    %733 = vxpose.xlu0.b32.cont [6/16] %v675, 128
    %734 = vxpose.xlu0.b32.cont [7/16] %v680, 128
    %735 = vxpose.xlu0.b32.cont [8/16] %v685, 128
    %736 = vxpose.xlu0.b32.cont [9/16] %v690, 128
    %737 = vxpose.xlu0.b32.cont [10/16] %v695, 128
    %738 = vxpose.xlu0.b32.cont [11/16] %v700, 128
    %739 = vxpose.xlu0.b32.cont [12/16] %v705, 128
    %740 = vxpose.xlu0.b32.cont [13/16] %v710, 128
    %741 = vxpose.xlu0.b32.cont [14/16] %v715, 128
    %742 = vxpose.xlu0.b32.cont [15/16] %v720, 128
    %743 = vxpose.xlu0.b32.end [16/16] %v725, 128
    %v744 = vpop.trf.xlu0
    %v745 = vpop.trf.xlu0
    %v746 = vpop.trf.xlu0
    %v747 = vpop.trf.xlu0
    %v748 = vpop.trf.xlu0
    %v749 = vpop.trf.xlu0
    %v750 = vpop.trf.xlu0
    %v751 = vpop.trf.xlu0
    %v752 = vpop.trf.xlu0
    %v753 = vpop.trf.xlu0
    %v754 = vpop.trf.xlu0
    %v755 = vpop.trf.xlu0
    %v756 = vpop.trf.xlu0
    %v757 = vpop.trf.xlu0
    %v758 = vpop.trf.xlu0
    %v759 = vpop.trf.xlu0
    %s760 = sld [smem:[#allocation2]]
    %v761 = vstv %s760
    %v762 = vadd.f32 %v744, %v761
    %v763 = vxor.u32 %v762, 2147483648
    %v764 = vmul.f32 %v763, 1.442695
    %v765 = vpow.pop %v764
    %v766 = vadd.f32 %v765, 1.0
    %v767 = vrcp.pop %v766
    %v768 = vmul.f32 1.0, %v767
    %769 = vst [vmem:[#allocation3] sm:$0x1] %v768
    // Predicated region
    $region30: #{tpu_custom_call.1} parent=1 // pred_check
      _
    $region31: #{tpu_custom_call.1} parent=1 // pred_check_branch
      %771 = sbr.rel (0) target = $region33
    $region32: #{tpu_custom_call.1} parent=1 // pred_region
      %s773 = ssub.s32 16, 16
      %774 = vsyncadd [#allocation4], %s773
      %s776 = sshll.u32 [#allocation3], 4
      %s777 = int_to_ptr.vmem [resolvable:$true] %s776
      %779 = dma.vmem_to_hbm [thread:$0]  %s777, 16, %s7, [#allocation4]
    $region33: #{tpu_custom_call.1} parent=1 // pred_fallthru
      _
    // Predicated region
    $region34: #{tpu_custom_call.1} parent=1 // pred_check
      _
    $region35: #{tpu_custom_call.1} parent=1 // pred_check_branch
      %781 = sbr.rel (0) target = $region37
    $region36: #{tpu_custom_call.1} parent=1 // pred_region
      %782 = dma.done [#allocation4], 16
    $region37: #{tpu_custom_call.1} parent=1 // pred_fallthru
      _
    %783 = vsyncpa [#allocation4], 1

</llo_original>
